<compile_context>
chip_gen: v7x
topology: tpu7x:2x2x1
jax: 0.10.0
libtpu: 0.0.40
codegen_flags: <defaults>
</compile_context>

<pallas_src>
import functools

import jax
import jax.numpy as jnp
from jax import lax
from jax.experimental import pallas as pl
from jax.experimental.pallas import tpu as pltpu

_EPS = 1e-6  # nn.CosineSimilarity(dim=1, eps=1e-06)


def _cos_loss_kernel(in_ref, out_feat_ref, loss_ref, *, tile_b, batch, needs_mask):
    """Accumulates sum(1 - cos) over batch tiles; scales to the mean at the end.

    in_ref, out_feat_ref : (tile_b, D) VMEM tiles
    loss_ref             : (1, 1) f32 VMEM output, resident across the grid
    """
    pid = pl.program_id(0)
    n_blocks = pl.num_programs(0)

    @pl.when(pid == 0)
    def _():
        loss_ref[...] = jnp.zeros_like(loss_ref)

    x = in_ref[...].astype(jnp.float32)
    y = out_feat_ref[...].astype(jnp.float32)

    # One pass over the tile: three fused lane-axis reductions.
    xy = jnp.sum(x * y, axis=-1, keepdims=True)  # (tile_b, 1)
    xx = jnp.sum(x * x, axis=-1, keepdims=True)
    yy = jnp.sum(y * y, axis=-1, keepdims=True)

    # cos = dot(x,y) / max(||x||*||y||, eps) = dot(x,y) * rsqrt(max(xx*yy, eps^2))
    inv = lax.rsqrt(jnp.maximum(xx * yy, jnp.float32(_EPS * _EPS)))
    one_minus_cos = 1.0 - xy * inv  # (tile_b, 1)

    if needs_mask:
        # Zero out rows past the true batch size (partial last tile only).
        row = pid * tile_b + lax.broadcasted_iota(jnp.int32, one_minus_cos.shape, 0)
        one_minus_cos = jnp.where(row < batch, one_minus_cos, 0.0)

    loss_ref[...] += jnp.sum(one_minus_cos, axis=0, keepdims=True)  # (1, 1)

    @pl.when(pid == n_blocks - 1)
    def _():
        loss_ref[...] = loss_ref[...] * jnp.float32(1.0 / batch)


def _compute_cos_loss(in_feat, out_feat, *, max_tile_b=None):
    """mean(1 - cos(in/||in||, out)) over the batch, tiled along B."""
    B, D = in_feat.shape
    assert out_feat.shape == (B, D), (in_feat.shape, out_feat.shape)

    # Pick the largest batch tile that keeps 2 inputs x 2 pipeline buffers well
    # inside the default scoped-VMEM budget (re-derived from D, not hard-coded).
    itemsize = max(jnp.dtype(in_feat.dtype).itemsize,
                   jnp.dtype(out_feat.dtype).itemsize)
    vmem_budget = 8 * 1024 * 1024  # per-operand working set target
    max_rows = max(8, vmem_budget // (2 * 2 * D * itemsize))
    tile_b = min(B, max_rows, 1024)
    if max_tile_b is not None:
        tile_b = min(tile_b, max_tile_b)
    if tile_b < B:
        # Sublane block dim must be a multiple of 8 unless it spans the full extent.
        tile_b = max(8, (tile_b // 8) * 8)
    grid_b = pl.cdiv(B, tile_b)
    needs_mask = (B % tile_b) != 0

    kernel = functools.partial(
        _cos_loss_kernel, tile_b=tile_b, batch=B, needs_mask=needs_mask)

    loss = pl.pallas_call(
        kernel,
        out_shape=jax.ShapeDtypeStruct((1, 1), jnp.float32),
        grid_spec=pltpu.PrefetchScalarGridSpec(
            num_scalar_prefetch=0,
            grid=(grid_b,),
            in_specs=[
                pl.BlockSpec((tile_b, D), lambda i: (i, 0)),
                pl.BlockSpec((tile_b, D), lambda i: (i, 0)),
            ],
            # Constant index_map -> output stays resident in VMEM (accumulator).
            out_specs=pl.BlockSpec((1, 1), lambda i: (0, 0)),
        ),
        compiler_params=pltpu.CompilerParams(
            dimension_semantics=("arbitrary",)),  # reduction axis
    )(in_feat, out_feat)
    return loss[0, 0]


# TODO(synk): add a jax.custom_vjp with a fused backward kernel (per-row rescale
# of x and y with the same (TILE_B, D) tiling) if this loss is used for training.


def loss_calculator_forward(batch_data, batch_output):
    """Mirrors LossCalculator.forward (mse / l2_loss members are unused there)."""
    smpl_semantic_loss = _compute_cos_loss(
        batch_output["real_smpl_text_emd"],
        batch_output["real_smpl_text_emd_pred"],
    )
    total_loss = smpl_semantic_loss
    return total_loss, {"smpl_semantic_loss": smpl_semantic_loss}


def _reference(in_feat, out_feat):
    """Pure-JAX mirror of the PyTorch module (for correctness check)."""
    x = in_feat.astype(jnp.float32)
    y = out_feat.astype(jnp.float32)
    xn = x / jnp.linalg.norm(x, axis=-1, keepdims=True)
    dot = jnp.sum(xn * y, axis=-1)
    denom = jnp.maximum(
        jnp.linalg.norm(xn, axis=-1) * jnp.linalg.norm(y, axis=-1), _EPS
    )
    return jnp.mean(1.0 - dot / denom)


if __name__ == "__main__":
    # Small shapes: batch=20 text embeddings with hidden dim 128. A forced tile
    # of 8 rows exercises the batch grid (3 steps) AND the partial-tile mask.
    B, D = 20, 128
    key = jax.random.PRNGKey(0)
    k1, k2 = jax.random.split(key)
    real_emd = jax.random.normal(k1, (B, D), dtype=jnp.float32)
    pred_emd = jax.random.normal(k2, (B, D), dtype=jnp.float32)

    batch_data = {}  # unused by forward, kept for signature parity
    batch_output = {
        "real_smpl_text_emd": real_emd,
        "real_smpl_text_emd_pred": pred_emd,
    }

    # Direct call with a small forced tile (multi-step grid + masked last tile).
    tiled_loss = jax.block_until_ready(
        _compute_cos_loss(real_emd, pred_emd, max_tile_b=8))

    # Module-level forward (auto tile selection -> single tile at this size).
    total_loss, loss_dict = loss_calculator_forward(batch_data, batch_output)
    total_loss = jax.block_until_ready(total_loss)

    ref = _reference(real_emd, pred_emd)
    assert jnp.allclose(tiled_loss, ref, rtol=1e-3, atol=1e-3), (tiled_loss, ref)
    assert jnp.allclose(total_loss, ref, rtol=1e-3, atol=1e-3), (total_loss, ref)
    assert jnp.allclose(loss_dict["smpl_semantic_loss"], total_loss)

    print("KERNEL_OK")
</pallas_src>

<mosaic_0001>
module attributes {stable_mosaic.version = 11 : i64} {
  func.func @_cos_loss_kernel(%arg0: i32, %arg1: memref<8x128xf32, #tpu.memory_space<vmem>>, %arg2: memref<8x128xf32, #tpu.memory_space<vmem>>, %arg3: memref<1x1xf32, #tpu.memory_space<vmem>>) attributes {dimension_semantics = [#tpu.dimension_semantics<arbitrary>], iteration_bounds = array<i64: 3>, scalar_prefetch = 0 : i64, scratch_operands = 0 : i64, tpu.core_type = #tpu.core_type<tc>, window_params = [{transform_indices = @transform_0, window_bounds = array<i64: 8, 128>}, {transform_indices = @transform_1, window_bounds = array<i64: 8, 128>}, {pipeline_mode = #tpu.pipeline_mode<synchronous>, transform_indices = @transform_2, window_bounds = array<i64: 1, 1>}]} {
    %c0_i32 = arith.constant 0 : i32
    %0 = arith.cmpi eq, %arg0, %c0_i32 : i32
    %1 = arith.extui %0 : i1 to i32
    %c0_i32_0 = arith.constant 0 : i32
    %2 = arith.cmpi ne, %1, %c0_i32_0 : i32
    scf.if %2 {
      %cst_15 = arith.constant 0.000000e+00 : f32
      %37 = vector.broadcast %cst_15 : f32 to vector<1x1xf32>
      %c0_16 = arith.constant 0 : index
      %c0_17 = arith.constant 0 : index
      %38 = vector.load %arg3[%c0_16, %c0_17] : memref<1x1xf32, #tpu.memory_space<vmem>>, vector<1x1xf32>
      tpu.vector_store %arg3[%c0_16, %c0_17], %37 {strides = array<i32>} : memref<1x1xf32, #tpu.memory_space<vmem>>, vector<1x1xf32>,
    } else {
    }
    %c0 = arith.constant 0 : index
    %c0_1 = arith.constant 0 : index
    %3 = vector.load %arg1[%c0, %c0_1] : memref<8x128xf32, #tpu.memory_space<vmem>>, vector<8x128xf32>
    %c0_2 = arith.constant 0 : index
    %c0_3 = arith.constant 0 : index
    %4 = vector.load %arg2[%c0_2, %c0_3] : memref<8x128xf32, #tpu.memory_space<vmem>>, vector<8x128xf32>
    %5 = arith.mulf %3, %4 : vector<8x128xf32>
    %cst = arith.constant dense<0.000000e+00> : vector<8xf32>
    %6 = vector.multi_reduction <add>, %5, %cst [1] : vector<8x128xf32> to vector<8xf32>
    %7 = vector.shape_cast %6 : vector<8xf32> to vector<8x1xf32>
    %8 = arith.mulf %3, %3 : vector<8x128xf32>
    %cst_4 = arith.constant dense<0.000000e+00> : vector<8xf32>
    %9 = vector.multi_reduction <add>, %8, %cst_4 [1] : vector<8x128xf32> to vector<8xf32>
    %10 = vector.shape_cast %9 : vector<8xf32> to vector<8x1xf32>
    %11 = arith.mulf %4, %4 : vector<8x128xf32>
    %cst_5 = arith.constant dense<0.000000e+00> : vector<8xf32>
    %12 = vector.multi_reduction <add>, %11, %cst_5 [1] : vector<8x128xf32> to vector<8xf32>
    %13 = vector.shape_cast %12 : vector<8xf32> to vector<8x1xf32>
    %14 = arith.mulf %10, %13 : vector<8x1xf32>
    %cst_6 = arith.constant 9.99999996E-13 : f32
    %15 = vector.broadcast %cst_6 : f32 to vector<8x1xf32>
    %16 = arith.maximumf %14, %15 : vector<8x1xf32>
    %17 = math.rsqrt %16 : vector<8x1xf32>
    %18 = arith.mulf %7, %17 : vector<8x1xf32>
    %cst_7 = arith.constant 1.000000e+00 : f32
    %19 = vector.broadcast %cst_7 : f32 to vector<8x1xf32>
    %20 = arith.subf %19, %18 : vector<8x1xf32>
    %c8_i32 = arith.constant 8 : i32
    %21 = arith.muli %arg0, %c8_i32 : i32
    %22 = tpu.iota {dimensions = array<i32: 0>} : vector<8x1xi32>
    %23 = vector.broadcast %21 : i32 to vector<8x1xi32>
    %24 = arith.addi %23, %22 : vector<8x1xi32>
    %c20_i32 = arith.constant 20 : i32
    %25 = vector.broadcast %c20_i32 : i32 to vector<8x1xi32>
    %26 = arith.cmpi slt, %24, %25 : vector<8x1xi32>
    %cst_8 = arith.constant 0.000000e+00 : f32
    %27 = vector.broadcast %cst_8 : f32 to vector<8x1xf32>
    %28 = arith.select %26, %20, %27 : vector<8x1xi1>, vector<8x1xf32>
    %c0_9 = arith.constant 0 : index
    %c0_10 = arith.constant 0 : index
    %29 = vector.load %arg3[%c0_9, %c0_10] : memref<1x1xf32, #tpu.memory_space<vmem>>, vector<1x1xf32>
    %cst_11 = arith.constant dense<0.000000e+00> : vector<1xf32>
    %30 = vector.multi_reduction <add>, %28, %cst_11 [0] : vector<8x1xf32> to vector<1xf32>
    %31 = vector.shape_cast %30 : vector<1xf32> to vector<1x1xf32>
    %32 = arith.addf %29, %31 : vector<1x1xf32>
    %c0_12 = arith.constant 0 : index
    %c0_13 = arith.constant 0 : index
    %33 = vector.load %arg3[%c0_12, %c0_13] : memref<1x1xf32, #tpu.memory_space<vmem>>, vector<1x1xf32>
    tpu.vector_store %arg3[%c0_12, %c0_13], %32 {strides = array<i32>} : memref<1x1xf32, #tpu.memory_space<vmem>>, vector<1x1xf32>,
    %c2_i32 = arith.constant 2 : i32
    %34 = arith.cmpi eq, %arg0, %c2_i32 : i32
    %35 = arith.extui %34 : i1 to i32
    %c0_i32_14 = arith.constant 0 : i32
    %36 = arith.cmpi ne, %35, %c0_i32_14 : i32
    scf.if %36 {
      %c0_15 = arith.constant 0 : index
      %c0_16 = arith.constant 0 : index
      %37 = vector.load %arg3[%c0_15, %c0_16] : memref<1x1xf32, #tpu.memory_space<vmem>>, vector<1x1xf32>
      %cst_17 = arith.constant 5.000000e-02 : f32
      %38 = vector.broadcast %cst_17 : f32 to vector<1x1xf32>
      %39 = arith.mulf %37, %38 : vector<1x1xf32>
      %c0_18 = arith.constant 0 : index
      %c0_19 = arith.constant 0 : index
      %40 = vector.load %arg3[%c0_18, %c0_19] : memref<1x1xf32, #tpu.memory_space<vmem>>, vector<1x1xf32>
      tpu.vector_store %arg3[%c0_18, %c0_19], %39 {strides = array<i32>} : memref<1x1xf32, #tpu.memory_space<vmem>>, vector<1x1xf32>,
    } else {
    }
    return
  }
  func.func @transform_0(%arg0: i32) -> (i32, i32) {
    %c0_i32 = arith.constant 0 : i32
    %c0_i32_0 = arith.constant 0 : i32
    return %arg0, %c0_i32 : i32, i32
  }
  func.func @transform_1(%arg0: i32) -> (i32, i32) {
    %c0_i32 = arith.constant 0 : i32
    %c0_i32_0 = arith.constant 0 : i32
    return %arg0, %c0_i32 : i32, i32
  }
  func.func @transform_2(%arg0: i32) -> (i32, i32) {
    %c0_i32 = arith.constant 0 : i32
    %c0_i32_0 = arith.constant 0 : i32
    %c0_i32_1 = arith.constant 0 : i32
    return %c0_i32, %c0_i32_0 : i32, i32
  }
}

</mosaic_0001>

<llo_original>
// kernel: tpu_custom_call.1
$region0: #{tpu_custom_call.1}
  #allocation0 [shape = 'u32[]', space=smem, size = 0x4, offset = 0x4, fixed_abs, tag = 'smem constant byte address 0x4 - core index']
  #allocation1 [shape = 'u32[144,128]{1,0:T(1,128)}', space=vmem, size = 0x12000, scoped, tag = 'internal scratch']
  %s0 = inlined_call_operand.hbm [shape: f32[20,128], index: 0, kind: input, shape index: {}]
  %s1 = inlined_call_operand.hbm [shape: f32[20,128], index: 1, kind: input, shape index: {}]
  %s2 = inlined_call_operand.hbm [shape: f32[1,1], index: 2, kind: output, shape index: {}]
  %s3 = sld [smem:[#allocation0]]
  $region57: #{tpu_custom_call.1} parent=0
    _
  %s5 = ssub.s32 1, %s3
  %s6 = scalar_select 0, %s5, %s3
  $region1: #{tpu_custom_call.1} parent=0
    #allocation2 [shape = 'u8[8192]{0}', space=vmem, size = 0x2000, scoped, tag = 'input window, operand 0']
    #allocation3 [shape = 's32[2]{0}', space=sflag, size = 0x8, scoped, tag = 'scoped memory for tpu_custom_call.1']
    #allocation4 [shape = 's32[2]{0}', space=sflag, size = 0x8, scoped, tag = 'scoped memory for tpu_custom_call.1']
    #allocation5 [shape = 'u8[8192]{0}', space=vmem, size = 0x2000, scoped, tag = 'input window, operand 1']
    #allocation6 [shape = 's32[2]{0}', space=sflag, size = 0x8, scoped, tag = 'scoped memory for tpu_custom_call.1']
    #allocation7 [shape = 'u8[512]{0}', space=vmem, size = 0x400, scoped, tag = 'output window, operand 0, single buffered']
    %7 = vsyncpa [#allocation3], 0
    %s8 = scalar_lea.sflag [#allocation3], 1
    %9 = vsyncpa %s8, 0
    %10 = vsyncpa [#allocation6], 0
    %s11 = scalar_lea.sflag [#allocation6], 1
    %12 = vsyncpa %s11, 0
    %13 = vsyncpa [#allocation4], 0
    loop: start=0, step=1, limit=5
    $region2: #{tpu_custom_call.1} parent=1 // loop_pre_header
      _
    $region3: #{tpu_custom_call.1} parent=1 // loop_header
      %s15 = sphi 0, %s19
      %p16 = scmp.ge.s32.totalorder %s15, 5
      %s25 = sphi 0, %s27
      %s28 = sphi 0, %s25
      %s29 = sphi 0, %s28
      %s45 = sphi 0, %s29
      %s51 = sphi 0, %s53
      %s54 = sphi 0, %s51
      %s55 = sphi 0, %s54
      %s71 = sphi 0, %s55
      %s75 = sphi 0, %s75
      %s77 = sphi 0, %s75
      %s78 = sphi 0, %s77
      %s92 = sphi 0, %s78
    $region4: #{tpu_custom_call.1} parent=1 // loop_header_branch
      %18 = sbr.rel (%p16) target = $region8
    $region5: #{tpu_custom_call.1} parent=1 // loop_body
      %s20 = ssub.s32 %s15, 1
      %s21 = ssub.s32 %s15, 2
      %s22 = sadd.s32 %s15, 1
      %s23 = ssub.s32 %s15, %s22
      %p24 = scmp.eq.s32.totalorder %s23, 0
      %s26 = sadd.s32 %s25, 1
      %s27 = scalar_select %p24, %s25, %s26
      %p30 = pneg %p24
      %p31 = scmp.eq.s32.totalorder %s15, 2
      %p32 = por %p30, %p31
      %p33 = scmp.ne.s32.totalorder %s25, %s28
      %p34 = scmp.eq.s32.totalorder %s15, 0
      %p35 = por %p33, %p34
      %p36 = scmp.ne.s32.totalorder %s25, %s28
      %p37 = scmp.eq.s32.totalorder %s20, 2
      %p38 = por %p36, %p37
      %p39 = scmp.ne.s32.totalorder %s28, %s29
      %p40 = scmp.eq.s32.totalorder %s20, 0
      %p41 = por %p39, %p40
      %p42 = scmp.ne.s32.totalorder %s28, %s29
      %p43 = scmp.eq.s32.totalorder %s21, 2
      %p44 = por %p42, %p43
      %p46 = scmp.ne.s32.totalorder %s29, %s45
      %p47 = scmp.eq.s32.totalorder %s21, 0
      %p48 = por %p46, %p47
      %s49 = ssub.s32 %s15, %s22
      %p50 = scmp.eq.s32.totalorder %s49, 0
      %s52 = sadd.s32 %s51, 1
      %s53 = scalar_select %p50, %s51, %s52
      %p56 = pneg %p50
      %p57 = scmp.eq.s32.totalorder %s15, 2
      %p58 = por %p56, %p57
      %p59 = scmp.ne.s32.totalorder %s51, %s54
      %p60 = scmp.eq.s32.totalorder %s15, 0
      %p61 = por %p59, %p60
      %p62 = scmp.ne.s32.totalorder %s51, %s54
      %p63 = scmp.eq.s32.totalorder %s20, 2
      %p64 = por %p62, %p63
      %p65 = scmp.ne.s32.totalorder %s54, %s55
      %p66 = scmp.eq.s32.totalorder %s20, 0
      %p67 = por %p65, %p66
      %p68 = scmp.ne.s32.totalorder %s54, %s55
      %p69 = scmp.eq.s32.totalorder %s21, 2
      %p70 = por %p68, %p69
      %p72 = scmp.ne.s32.totalorder %s55, %s71
      %p73 = scmp.eq.s32.totalorder %s21, 0
      %p74 = por %p72, %p73
      %s76 = sadd.s32 %s75, 1
      %p79 = scmp.eq.s32.totalorder %s15, 2
      %p80 = scmp.ne.s32.totalorder %s75, %s77
      %p81 = scmp.eq.s32.totalorder %s15, 0
      %p82 = por %p80, %p81
      %p83 = scmp.ne.s32.totalorder %s75, %s77
      %p84 = scmp.eq.s32.totalorder %s20, 2
      %p85 = por %p83, %p84
      %p86 = scmp.ne.s32.totalorder %s77, %s78
      %p87 = scmp.eq.s32.totalorder %s20, 0
      %p88 = por %p86, %p87
      %p89 = scmp.ne.s32.totalorder %s77, %s78
      %p90 = scmp.eq.s32.totalorder %s21, 2
      %p91 = por %p89, %p90
      %p93 = scmp.ne.s32.totalorder %s78, %s92
      %p94 = scmp.eq.s32.totalorder %s21, 0
      %p95 = por %p93, %p94
      %p96 = scmp.le.s32.totalorder 1, %s15
      %p97 = scmp.lt.s32.totalorder %s15, 4
      %p98 = pnand %p96, %p97
      %p99 = pneg %p98
      // Predicated region
      $region9: #{tpu_custom_call.1} parent=5 // pred_check
        _
      $region10: #{tpu_custom_call.1} parent=5 // pred_check_branch
        %101 = sbr.rel (%p98) target = $region12
      $region11: #{tpu_custom_call.1} parent=5 // pred_region
        %s102 = ssub.s32 %s15, 1
      $region12: #{tpu_custom_call.1} parent=5 // pred_fallthru
        _
      %p103 = scmp.lt.s32.totalorder %s15, 3
      // Predicated region
      $region13: #{tpu_custom_call.1} parent=5 // pred_check
        %p104 = pneg %p103
      $region14: #{tpu_custom_call.1} parent=5 // pred_check_branch
        %106 = sbr.rel (%p104) target = $region16
      $region15: #{tpu_custom_call.1} parent=5 // pred_region
        // Predicated region
        $region17: #{tpu_custom_call.1} parent=15 // pred_check
          %p107 = pneg %p35
        $region18: #{tpu_custom_call.1} parent=15 // pred_check_branch
          %109 = sbr.rel (%p107) target = $region20
        $region19: #{tpu_custom_call.1} parent=15 // pred_region
          %s110 = sand.u32 %s25, 1
          %s111 = scalar_lea.sflag [#allocation3], %s110
          %s112 = sand.u32 %s25, 1
          %s113 = smul.addr %s112, 8
          %s114 = scalar_lea.vmem [#allocation2], %s113
          %s116 = ssub.s32 128, 128
          %117 = vsyncadd %s111, %s116
          %s118 = smul.addr %s15, 128
          %s119 = scalar_lea.hbm %s0, %s118
          %s121 = sshll.u32 %s114, 4
          %s122 = int_to_ptr.vmem [resolvable:$true] %s121
          %124 = dma.hbm_to_vmem [thread:$0]  %s119, 128, %s122, %s111
        $region20: #{tpu_custom_call.1} parent=15 // pred_fallthru
          _
        // Predicated region
        $region21: #{tpu_custom_call.1} parent=15 // pred_check
          %p125 = pneg %p61
        $region22: #{tpu_custom_call.1} parent=15 // pred_check_branch
          %127 = sbr.rel (%p125) target = $region24
        $region23: #{tpu_custom_call.1} parent=15 // pred_region
          %s128 = sand.u32 %s51, 1
          %s129 = scalar_lea.sflag [#allocation6], %s128
          %s130 = sand.u32 %s51, 1
          %s131 = smul.addr %s130, 8
          %s132 = scalar_lea.vmem [#allocation5], %s131
          %s134 = ssub.s32 128, 128
          %135 = vsyncadd %s129, %s134
          %s136 = smul.addr %s15, 128
          %s137 = scalar_lea.hbm %s1, %s136
          %s139 = sshll.u32 %s132, 4
          %s140 = int_to_ptr.vmem [resolvable:$true] %s139
          %142 = dma.hbm_to_vmem [thread:$0]  %s137, 128, %s140, %s129
        $region24: #{tpu_custom_call.1} parent=15 // pred_fallthru
          _
      $region16: #{tpu_custom_call.1} parent=5 // pred_fallthru
        _
      %p143 = scmp.le.s32.totalorder 1, %s15
      %p144 = scmp.lt.s32.totalorder %s15, 4
      %p145 = pnand %p143, %p144
      %p146 = pneg %p145
      // Predicated region
      $region25: #{tpu_custom_call.1} parent=5 // pred_check
        _
      $region26: #{tpu_custom_call.1} parent=5 // pred_check_branch
        %148 = sbr.rel (%p145) target = $region28
      $region27: #{tpu_custom_call.1} parent=5 // pred_region
        %s149 = ssub.s32 %s15, 1
        %s150 = sand.u32 %s28, 1
        %s151 = scalar_lea.sflag [#allocation3], %s150
        %s152 = sand.u32 %s28, 1
        %s153 = smul.addr %s152, 8
        %s154 = scalar_lea.vmem [#allocation2], %s153
        // Predicated region
        $region29: #{tpu_custom_call.1} parent=27 // pred_check
          %p155 = pneg %p41
        $region30: #{tpu_custom_call.1} parent=27 // pred_check_branch
          %157 = sbr.rel (%p155) target = $region32
        $region31: #{tpu_custom_call.1} parent=27 // pred_region
          %158 = dma.done %s151, 128
        $region32: #{tpu_custom_call.1} parent=27 // pred_fallthru
          _
        %s159 = sand.u32 %s54, 1
        %s160 = scalar_lea.sflag [#allocation6], %s159
        %s161 = sand.u32 %s54, 1
        %s162 = smul.addr %s161, 8
        %s163 = scalar_lea.vmem [#allocation5], %s162
        // Predicated region
        $region33: #{tpu_custom_call.1} parent=27 // pred_check
          %p164 = pneg %p67
        $region34: #{tpu_custom_call.1} parent=27 // pred_check_branch
          %166 = sbr.rel (%p164) target = $region36
        $region35: #{tpu_custom_call.1} parent=27 // pred_region
          %167 = dma.done %s160, 128
        $region36: #{tpu_custom_call.1} parent=27 // pred_fallthru
          _
        %s168 = sand.u32 %s28, 1
        %s169 = scalar_lea.sflag [#allocation3], %s168
        %s170 = sand.u32 %s28, 1
        %s171 = smul.addr %s170, 8
        %s172 = scalar_lea.vmem [#allocation2], %s171
        %p173 = pneg %p41
        %p174 = pneg %p38
        %s175 = sand.u32 %s54, 1
        %s176 = scalar_lea.sflag [#allocation6], %s175
        %s177 = sand.u32 %s54, 1
        %s178 = smul.addr %s177, 8
        %s179 = scalar_lea.vmem [#allocation5], %s178
        %p180 = pneg %p67
        %p181 = pneg %p64
        %p182 = pneg %p88
        %p183 = pneg %p85
        %p184 = scmp.eq.s32.totalorder %s20, 0
        // Predicated region
        $region37: #{tpu_custom_call.1} parent=27 // pred_check
          %p185 = pneg %p184
        $region38: #{tpu_custom_call.1} parent=27 // pred_check_branch
          %187 = sbr.rel (%p185) target = $region40
        $region39: #{tpu_custom_call.1} parent=27 // pred_region
          %vm188 = vcmask 0
          %189 = vst.msk [vmem:[#allocation7] sm:$0x1] %vm188, 0.0
        $region40: #{tpu_custom_call.1} parent=27 // pred_fallthru
          _
        %v190 = vld [vmem:[%s154] sm:$0xff]
        %v191 = vld [vmem:[%s163] sm:$0xff]
        %v192 = vmul.f32 %v190, %v191
        %193 = vadd.xlane.f32.xlu0 %v192
        %v194 = vpop.xlane.xlu0 %193
        %v195 = vmul.f32 %v190, %v190
        %196 = vadd.xlane.f32.xlu0 %v195
        %v197 = vpop.xlane.xlu0 %196
        %v198 = vmul.f32 %v191, %v191
        %199 = vadd.xlane.f32.xlu0 %v198
        %v200 = vpop.xlane.xlu0 %199
        %v201 = vmul.f32 %v197, %v200
        %v202 = vmax.f32 %v201, 1e-12
        %v203 = vrsqrt.pop %v202
        %v204 = vmul.f32 %v194, %v203
        %v205 = vsub.f32 1.0, %v204
        %s206 = smul.u32 %s20, 8
        %v207 = vlaneseq
        %v208 = vshrl.u32 %v207, 7
        %v209 = vstv %s206
        %v210 = vadd.s32 %v209, %v208
        %vm211 = vcmp.lt.s32.totalorder %v210, 20
        %v212 = vsel %vm211, %v205, 0.0
        %v213 = vld [vmem:[#allocation7] sm:$0x1]
        %v214 = vrot.slane %v212, 4
        %v215 = vadd.f32 %v212, %v214
        %v216 = vrot.slane %v215, 2
        %v217 = vadd.f32 %v215, %v216
        %v218 = vrot.slane %v217, 1
        %v219 = vadd.f32 %v217, %v218
        %v220 = vadd.f32 %v213, %v219
        %vm221 = vcmask 0
        %222 = vst.msk [vmem:[#allocation7] sm:$0x1] %vm221, %v220
        %p223 = scmp.eq.s32.totalorder %s20, 2
        // Predicated region
        $region41: #{tpu_custom_call.1} parent=27 // pred_check
          %p224 = pneg %p223
        $region42: #{tpu_custom_call.1} parent=27 // pred_check_branch
          %226 = sbr.rel (%p224) target = $region44
        $region43: #{tpu_custom_call.1} parent=27 // pred_region
          %v227 = vld [vmem:[#allocation7] sm:$0x1]
          %v228 = vmul.f32 %v227, 0.05
          %229 = vst.msk [vmem:[#allocation7] sm:$0x1] %vm221, %v228
        $region44: #{tpu_custom_call.1} parent=27 // pred_fallthru
          _
        // Predicated region
        $region45: #{tpu_custom_call.1} parent=27 // pred_check
          %p230 = pneg %p85
        $region46: #{tpu_custom_call.1} parent=27 // pred_check_branch
          %232 = sbr.rel (%p230) target = $region48
        $region47: #{tpu_custom_call.1} parent=27 // pred_region
          %s234 = ssub.s32 16, 16
          %235 = vsyncadd [#allocation4], %s234
          %s237 = sshll.u32 [#allocation7], 4
          %s238 = int_to_ptr.vmem [resolvable:$true] %s237
          %240 = dma.vmem_to_hbm [thread:$0]  %s238, 16, %s2, [#allocation4]
        $region48: #{tpu_custom_call.1} parent=27 // pred_fallthru
          _
        // Predicated region
        $region49: #{tpu_custom_call.1} parent=27 // pred_check
          %p241 = pneg %p85
        $region50: #{tpu_custom_call.1} parent=27 // pred_check_branch
          %243 = sbr.rel (%p241) target = $region52
        $region51: #{tpu_custom_call.1} parent=27 // pred_region
          %244 = dma.done [#allocation4], 16
        $region52: #{tpu_custom_call.1} parent=27 // pred_fallthru
          _
      $region28: #{tpu_custom_call.1} parent=5 // pred_fallthru
        _
      %p245 = scmp.le.s32.totalorder 2, %s15
      // Predicated region
      $region53: #{tpu_custom_call.1} parent=5 // pred_check
        %p246 = pneg %p245
      $region54: #{tpu_custom_call.1} parent=5 // pred_check_branch
        %248 = sbr.rel (%p246) target = $region56
      $region55: #{tpu_custom_call.1} parent=5 // pred_region
        %s249 = ssub.s32 %s15, 2
      $region56: #{tpu_custom_call.1} parent=5 // pred_fallthru
        _
    $region6: #{tpu_custom_call.1} parent=1 // loop_footer
      %s19 = sadd.s32 1, %s15
    $region7: #{tpu_custom_call.1} parent=1 // loop_footer_branch
      %14 = sbr.rel target = $region3
    $region8: #{tpu_custom_call.1} parent=1 // loop_exit
      _
    %250 = vsyncpa [#allocation3], 1
    %s251 = scalar_lea.sflag [#allocation3], 1
    %252 = vsyncpa %s251, 1
    %253 = vsyncpa [#allocation6], 1
    %s254 = scalar_lea.sflag [#allocation6], 1
    %255 = vsyncpa %s254, 1
    %256 = vsyncpa [#allocation4], 1
    %s257 = scalar_lea.sflag [#allocation4], 1
    %258 = vsyncpa %s257, 1

</llo_original>
